<compile_context>
chip_gen: v7x
topology: tpu7x:2x2x1
jax: 0.10.0
libtpu: 0.0.40
codegen_flags: <defaults>
</compile_context>

<pallas_src>
import jax
import jax.numpy as jnp
from jax.experimental import pallas as pl
from jax.experimental.pallas import tpu as pltpu


def _round_up(a, b):
    return (a + b - 1) // b * b


def _cdiv(a, b):
    return (a + b - 1) // b


def rnn_forward_kernel(xsel_ref, sel_ref, whh_ref, wl_ref, bl_ref, out_ref):
    """RNN unroll + final linear head for one lane-packed batch tile.

    xsel_ref : (tile_r, P*(L+1))  packed [x | 1] rows (P batch rows / vreg row)
    sel_ref  : (P*(L+1), L*Hp)    selector: W_ih^T per (slot, t) + folded bias row
    whh_ref  : (Hp, Hp)           block-diagonal W_hh^T  (Hp = P*H1)
    wl_ref   : (Hp, P*C)          block-diagonal W_linear^T
    bl_ref   : (1, P*C)           b_linear tiled per slot
    out_ref  : (tile_r, P*C)      packed logits
    """
    Hp = whh_ref.shape[0]
    L = sel_ref.shape[1] // Hp

    # ONE MXU matmul produces the input projection + folded biases for every
    # time step, lane-dense and already in h's packed (sublane=row, lane=Hp)
    # layout. The per-step reads below are 128-aligned static lane slices.
    xproj = jnp.dot(xsel_ref[...], sel_ref[...],
                    preferred_element_type=jnp.float32)      # (tile_r, L*Hp)

    whh = whh_ref[...]
    # h_0 == 0  =>  first step is just relu of the projected input.
    h = jnp.maximum(xproj[:, 0:Hp], 0.0)

    # L is a small compile-time constant -> static unroll keeps full LLO
    # scheduling visibility over the serial chain.
    # TODO(synk): switch to lax.fori_loop(..., unroll=4) over a time-major
    # buffer if L ever grows beyond ~32 (vreg pressure / compile time).
    for t in range(1, L):
        h = jnp.maximum(
            xproj[:, t * Hp:(t + 1) * Hp]
            + jnp.dot(h, whh, preferred_element_type=jnp.float32),
            0.0)

    # dropout(p=0.5, training=False) is identity; final linear head (packed).
    out_ref[...] = (jnp.dot(h, wl_ref[...], preferred_element_type=jnp.float32)
                    + bl_ref[...]).astype(out_ref.dtype)


def rnn_classifier_forward(x, params, *, max_tile_rows=256):
    """x: (N, L) float32. params: dict of model weights. Returns (N, num_classes)."""
    N, L = x.shape
    H1 = params["w_hh"].shape[0]
    C = params["w_lin"].shape[0]

    # Lane-packing factor: how many batch rows share one 128-lane vreg row.
    pack = 128 // H1 if (H1 <= 128 and 128 % H1 == 0) else 1
    Hp = pack * H1

    # ---- one-time wrapper glue (weights -> packed / block-diagonal) ---------
    wih = params["w_ih"].reshape(H1).astype(jnp.float32)           # (H1,)  input_size==1
    bias = (params["b_ih"] + params["b_hh"]).astype(jnp.float32)   # (H1,)  folded biases
    whh_t = params["w_hh"].T.astype(jnp.float32)                   # (H1, H1)
    wl_t = params["w_lin"].T.astype(jnp.float32)                   # (H1, C)
    bl = params["b_lin"].astype(jnp.float32)                       # (C,)

    eye_p = jnp.eye(pack, dtype=jnp.float32)
    eye_l = jnp.eye(L, dtype=jnp.float32)

    # Selector matrix S: (pack*(L+1), L*Hp).
    #   row j*(L+1)+t (t<L): W_ih^T into lanes [t*Hp + j*H1 : t*Hp + (j+1)*H1]
    #   row j*(L+1)+L      : (b_ih+b_hh) into those lanes for every t.
    sel_w = (eye_p[:, None, None, :, None]
             * eye_l[None, :, :, None, None]
             * wih[None, None, None, None, :])                     # (P, L, L, P, H1)
    sel_b = (eye_p[:, None, None, :, None]
             * jnp.ones((1, 1, L, 1, 1), jnp.float32)
             * bias[None, None, None, None, :])                    # (P, 1, L, P, H1)
    sel = jnp.concatenate([sel_w, sel_b], axis=1)                  # (P, L+1, L, P, H1)
    sel = sel.reshape(pack * (L + 1), L * Hp)

    whh_bd = jnp.kron(eye_p, whh_t)                                # (Hp, Hp) block-diag
    wl_bd = jnp.kron(eye_p, wl_t)                                  # (Hp, P*C) block-diag
    bl_p = jnp.tile(bl, (pack,)).reshape(1, pack * C)              # (1, P*C)

    # ---- batch tiling in packed-row space -----------------------------------
    # VMEM guardrail: xproj is tile_r * L * Hp * 4 B per tile; keep it well
    # under the scoped limit (v7x: 64 MiB physical / 32 MiB default scoped).
    max_tile_rows = max(8, min(max_tile_rows, (8 << 20) // max(1, L * Hp * 4)))
    max_tile_rows = _round_up(max_tile_rows, 8)

    r_needed = _cdiv(N, pack)                      # packed rows of real data
    min_grid = 2 if r_needed >= 16 else 1          # keep both v7x TCs busy
    grid = max(min_grid, _cdiv(r_needed, max_tile_rows))
    tile_r = _round_up(_cdiv(r_needed, grid), 8)   # sublane-aligned tile
    n_pad = grid * tile_r * pack
    R = n_pad // pack

    x = x.astype(jnp.float32)
    if n_pad != N:
        x = jnp.pad(x, ((0, n_pad - N), (0, 0)))
    # Augment with a ones column (drives the folded-bias row of S) and pack
    # `pack` consecutive batch rows into one packed row.
    x_aug = jnp.concatenate([x, jnp.ones((n_pad, 1), jnp.float32)], axis=1)
    x_packed = x_aug.reshape(R, pack * (L + 1))

    out_packed = pl.pallas_call(
        rnn_forward_kernel,
        out_shape=jax.ShapeDtypeStruct((R, pack * C), jnp.float32),
        grid_spec=pltpu.PrefetchScalarGridSpec(
            num_scalar_prefetch=0,
            grid=(grid,),
            in_specs=[
                pl.BlockSpec((tile_r, pack * (L + 1)), lambda i: (i, 0)),  # packed x
                pl.BlockSpec((pack * (L + 1), L * Hp), lambda i: (0, 0)),  # selector S
                pl.BlockSpec((Hp, Hp), lambda i: (0, 0)),                  # block-diag W_hh^T
                pl.BlockSpec((Hp, pack * C), lambda i: (0, 0)),            # block-diag W_lin^T
                pl.BlockSpec((1, pack * C), lambda i: (0, 0)),             # packed b_lin
            ],
            out_specs=pl.BlockSpec((tile_r, pack * C), lambda i: (i, 0)),
        ),
        compiler_params=pltpu.CompilerParams(
            dimension_semantics=("parallel",)),
    )(x_packed, sel, whh_bd, wl_bd, bl_p)

    # De-interleave: packed row r, lane block j  ->  batch row r*pack + j.
    out = out_packed.reshape(n_pad, C)
    return out[:N]


def init_params(key, h1=32, num_classes=4):
    """Deterministic init mimicking PyTorch's uniform(-1/sqrt(h1), 1/sqrt(h1))."""
    ks = jax.random.split(key, 6)
    bound = 1.0 / jnp.sqrt(jnp.float32(h1))
    u = lambda k, shape: jax.random.uniform(k, shape, jnp.float32, -bound, bound)
    return {
        "w_ih": u(ks[0], (h1, 1)),           # RNNCell weight_ih : (hidden, input=1)
        "w_hh": u(ks[1], (h1, h1)),          # RNNCell weight_hh : (hidden, hidden)
        "b_ih": u(ks[2], (h1,)),
        "b_hh": u(ks[3], (h1,)),
        "w_lin": u(ks[4], (num_classes, h1)),
        "b_lin": u(ks[5], (num_classes,)),
    }


def reference_forward(x, params):
    """Pure-JAX reference matching the PyTorch forward (eval mode)."""
    N, L = x.shape
    h = jnp.zeros((N, params["w_hh"].shape[0]), jnp.float32)
    for t in range(L):
        xt = x[:, t:t + 1]                                        # (N, 1)
        pre = xt @ params["w_ih"].T + params["b_ih"] \
            + h @ params["w_hh"].T + params["b_hh"]
        h = jnp.maximum(pre, 0.0)
    return h @ params["w_lin"].T + params["b_lin"]


if __name__ == "__main__":
    key = jax.random.PRNGKey(0)
    k_params, k_x = jax.random.split(key)

    N, L = 2, 8            # batch=2, sequence length=8
    h1, num_classes = 32, 4

    params = init_params(k_params, h1=h1, num_classes=num_classes)
    x = jax.random.normal(k_x, (N, L), jnp.float32)

    out = rnn_classifier_forward(x, params)
    out = jax.block_until_ready(out)

    ref = reference_forward(x, params)
    assert out.shape == (N, num_classes)
    assert jnp.allclose(out, ref, atol=1e-4, rtol=1e-4), (out, ref)

    print("KERNEL_OK")
</pallas_src>

<mosaic_0001>
module attributes {stable_mosaic.version = 11 : i64} {
  func.func @rnn_forward_kernel(%arg0: i32, %arg1: memref<8x36xf32, #tpu.memory_space<vmem>>, %arg2: memref<36x1024xf32, #tpu.memory_space<vmem>>, %arg3: memref<128x128xf32, #tpu.memory_space<vmem>>, %arg4: memref<128x16xf32, #tpu.memory_space<vmem>>, %arg5: memref<1x16xf32, #tpu.memory_space<vmem>>, %arg6: memref<8x16xf32, #tpu.memory_space<vmem>>) attributes {dimension_semantics = [#tpu.dimension_semantics<parallel>], iteration_bounds = array<i64: 1>, scalar_prefetch = 0 : i64, scratch_operands = 0 : i64, tpu.core_type = #tpu.core_type<tc>, window_params = [{transform_indices = @transform_0, window_bounds = array<i64: 8, 36>}, {pipeline_mode = #tpu.pipeline_mode<synchronous>, transform_indices = @transform_1, window_bounds = array<i64: 36, 1024>}, {pipeline_mode = #tpu.pipeline_mode<synchronous>, transform_indices = @transform_2, window_bounds = array<i64: 128, 128>}, {pipeline_mode = #tpu.pipeline_mode<synchronous>, transform_indices = @transform_3, window_bounds = array<i64: 128, 16>}, {pipeline_mode = #tpu.pipeline_mode<synchronous>, transform_indices = @transform_4, window_bounds = array<i64: 1, 16>}, {transform_indices = @transform_5, window_bounds = array<i64: 8, 16>}]} {
    %c0 = arith.constant 0 : index
    %c0_0 = arith.constant 0 : index
    %0 = vector.load %arg1[%c0, %c0_0] : memref<8x36xf32, #tpu.memory_space<vmem>>, vector<8x36xf32>
    %c0_1 = arith.constant 0 : index
    %c0_2 = arith.constant 0 : index
    %1 = vector.load %arg2[%c0_1, %c0_2] : memref<36x1024xf32, #tpu.memory_space<vmem>>, vector<36x1024xf32>
    %cst = arith.constant dense<0.000000e+00> : vector<8x1024xf32>
    %2 = tpu.matmul %0, %1, %cst {dimension_numbers = #tpu.dot_dimension_numbers<[1], [0], [0], [1], [0, 0, 1, 1], [], []>} : vector<8x36xf32>, vector<36x1024xf32>, vector<8x1024xf32> -> vector<8x1024xf32>
    %c0_3 = arith.constant 0 : index
    %c0_4 = arith.constant 0 : index
    %3 = vector.load %arg3[%c0_3, %c0_4] : memref<128x128xf32, #tpu.memory_space<vmem>>, vector<128x128xf32>
    %4 = vector.extract_strided_slice %2 {offsets = [0, 0], sizes = [8, 128], strides = [1, 1]} : vector<8x1024xf32> to vector<8x128xf32>
    %cst_5 = arith.constant 0.000000e+00 : f32
    %5 = vector.broadcast %cst_5 : f32 to vector<8x128xf32>
    %6 = arith.maximumf %4, %5 : vector<8x128xf32>
    %7 = vector.extract_strided_slice %2 {offsets = [0, 128], sizes = [8, 128], strides = [1, 1]} : vector<8x1024xf32> to vector<8x128xf32>
    %cst_6 = arith.constant dense<0.000000e+00> : vector<8x128xf32>
    %8 = tpu.matmul %6, %3, %cst_6 {dimension_numbers = #tpu.dot_dimension_numbers<[1], [0], [0], [1], [0, 0, 1, 1], [], []>} : vector<8x128xf32>, vector<128x128xf32>, vector<8x128xf32> -> vector<8x128xf32>
    %9 = arith.addf %7, %8 : vector<8x128xf32>
    %cst_7 = arith.constant 0.000000e+00 : f32
    %10 = vector.broadcast %cst_7 : f32 to vector<8x128xf32>
    %11 = arith.maximumf %9, %10 : vector<8x128xf32>
    %12 = vector.extract_strided_slice %2 {offsets = [0, 256], sizes = [8, 128], strides = [1, 1]} : vector<8x1024xf32> to vector<8x128xf32>
    %cst_8 = arith.constant dense<0.000000e+00> : vector<8x128xf32>
    %13 = tpu.matmul %11, %3, %cst_8 {dimension_numbers = #tpu.dot_dimension_numbers<[1], [0], [0], [1], [0, 0, 1, 1], [], []>} : vector<8x128xf32>, vector<128x128xf32>, vector<8x128xf32> -> vector<8x128xf32>
    %14 = arith.addf %12, %13 : vector<8x128xf32>
    %cst_9 = arith.constant 0.000000e+00 : f32
    %15 = vector.broadcast %cst_9 : f32 to vector<8x128xf32>
    %16 = arith.maximumf %14, %15 : vector<8x128xf32>
    %17 = vector.extract_strided_slice %2 {offsets = [0, 384], sizes = [8, 128], strides = [1, 1]} : vector<8x1024xf32> to vector<8x128xf32>
    %cst_10 = arith.constant dense<0.000000e+00> : vector<8x128xf32>
    %18 = tpu.matmul %16, %3, %cst_10 {dimension_numbers = #tpu.dot_dimension_numbers<[1], [0], [0], [1], [0, 0, 1, 1], [], []>} : vector<8x128xf32>, vector<128x128xf32>, vector<8x128xf32> -> vector<8x128xf32>
    %19 = arith.addf %17, %18 : vector<8x128xf32>
    %cst_11 = arith.constant 0.000000e+00 : f32
    %20 = vector.broadcast %cst_11 : f32 to vector<8x128xf32>
    %21 = arith.maximumf %19, %20 : vector<8x128xf32>
    %22 = vector.extract_strided_slice %2 {offsets = [0, 512], sizes = [8, 128], strides = [1, 1]} : vector<8x1024xf32> to vector<8x128xf32>
    %cst_12 = arith.constant dense<0.000000e+00> : vector<8x128xf32>
    %23 = tpu.matmul %21, %3, %cst_12 {dimension_numbers = #tpu.dot_dimension_numbers<[1], [0], [0], [1], [0, 0, 1, 1], [], []>} : vector<8x128xf32>, vector<128x128xf32>, vector<8x128xf32> -> vector<8x128xf32>
    %24 = arith.addf %22, %23 : vector<8x128xf32>
    %cst_13 = arith.constant 0.000000e+00 : f32
    %25 = vector.broadcast %cst_13 : f32 to vector<8x128xf32>
    %26 = arith.maximumf %24, %25 : vector<8x128xf32>
    %27 = vector.extract_strided_slice %2 {offsets = [0, 640], sizes = [8, 128], strides = [1, 1]} : vector<8x1024xf32> to vector<8x128xf32>
    %cst_14 = arith.constant dense<0.000000e+00> : vector<8x128xf32>
    %28 = tpu.matmul %26, %3, %cst_14 {dimension_numbers = #tpu.dot_dimension_numbers<[1], [0], [0], [1], [0, 0, 1, 1], [], []>} : vector<8x128xf32>, vector<128x128xf32>, vector<8x128xf32> -> vector<8x128xf32>
    %29 = arith.addf %27, %28 : vector<8x128xf32>
    %cst_15 = arith.constant 0.000000e+00 : f32
    %30 = vector.broadcast %cst_15 : f32 to vector<8x128xf32>
    %31 = arith.maximumf %29, %30 : vector<8x128xf32>
    %32 = vector.extract_strided_slice %2 {offsets = [0, 768], sizes = [8, 128], strides = [1, 1]} : vector<8x1024xf32> to vector<8x128xf32>
    %cst_16 = arith.constant dense<0.000000e+00> : vector<8x128xf32>
    %33 = tpu.matmul %31, %3, %cst_16 {dimension_numbers = #tpu.dot_dimension_numbers<[1], [0], [0], [1], [0, 0, 1, 1], [], []>} : vector<8x128xf32>, vector<128x128xf32>, vector<8x128xf32> -> vector<8x128xf32>
    %34 = arith.addf %32, %33 : vector<8x128xf32>
    %cst_17 = arith.constant 0.000000e+00 : f32
    %35 = vector.broadcast %cst_17 : f32 to vector<8x128xf32>
    %36 = arith.maximumf %34, %35 : vector<8x128xf32>
    %37 = vector.extract_strided_slice %2 {offsets = [0, 896], sizes = [8, 128], strides = [1, 1]} : vector<8x1024xf32> to vector<8x128xf32>
    %cst_18 = arith.constant dense<0.000000e+00> : vector<8x128xf32>
    %38 = tpu.matmul %36, %3, %cst_18 {dimension_numbers = #tpu.dot_dimension_numbers<[1], [0], [0], [1], [0, 0, 1, 1], [], []>} : vector<8x128xf32>, vector<128x128xf32>, vector<8x128xf32> -> vector<8x128xf32>
    %39 = arith.addf %37, %38 : vector<8x128xf32>
    %cst_19 = arith.constant 0.000000e+00 : f32
    %40 = vector.broadcast %cst_19 : f32 to vector<8x128xf32>
    %41 = arith.maximumf %39, %40 : vector<8x128xf32>
    %c0_20 = arith.constant 0 : index
    %c0_21 = arith.constant 0 : index
    %42 = vector.load %arg4[%c0_20, %c0_21] : memref<128x16xf32, #tpu.memory_space<vmem>>, vector<128x16xf32>
    %cst_22 = arith.constant dense<0.000000e+00> : vector<8x16xf32>
    %43 = tpu.matmul %41, %42, %cst_22 {dimension_numbers = #tpu.dot_dimension_numbers<[1], [0], [0], [1], [0, 0, 1, 1], [], []>} : vector<8x128xf32>, vector<128x16xf32>, vector<8x16xf32> -> vector<8x16xf32>
    %c0_23 = arith.constant 0 : index
    %c0_24 = arith.constant 0 : index
    %44 = vector.load %arg5[%c0_23, %c0_24] : memref<1x16xf32, #tpu.memory_space<vmem>>, vector<1x16xf32>
    %45 = vector.broadcast %44 : vector<1x16xf32> to vector<8x16xf32>
    %46 = arith.addf %43, %45 : vector<8x16xf32>
    %c0_25 = arith.constant 0 : index
    %c0_26 = arith.constant 0 : index
    %47 = vector.load %arg6[%c0_25, %c0_26] : memref<8x16xf32, #tpu.memory_space<vmem>>, vector<8x16xf32>
    tpu.vector_store %arg6[%c0_25, %c0_26], %46 {strides = array<i32>} : memref<8x16xf32, #tpu.memory_space<vmem>>, vector<8x16xf32>,
    return
  }
  func.func @transform_0(%arg0: i32) -> (i32, i32) {
    %c0_i32 = arith.constant 0 : i32
    %c0_i32_0 = arith.constant 0 : i32
    return %arg0, %c0_i32 : i32, i32
  }
  func.func @transform_1(%arg0: i32) -> (i32, i32) {
    %c0_i32 = arith.constant 0 : i32
    %c0_i32_0 = arith.constant 0 : i32
    %c0_i32_1 = arith.constant 0 : i32
    return %c0_i32, %c0_i32_0 : i32, i32
  }
  func.func @transform_2(%arg0: i32) -> (i32, i32) {
    %c0_i32 = arith.constant 0 : i32
    %c0_i32_0 = arith.constant 0 : i32
    %c0_i32_1 = arith.constant 0 : i32
    return %c0_i32, %c0_i32_0 : i32, i32
  }
  func.func @transform_3(%arg0: i32) -> (i32, i32) {
    %c0_i32 = arith.constant 0 : i32
    %c0_i32_0 = arith.constant 0 : i32
    %c0_i32_1 = arith.constant 0 : i32
    return %c0_i32, %c0_i32_0 : i32, i32
  }
  func.func @transform_4(%arg0: i32) -> (i32, i32) {
    %c0_i32 = arith.constant 0 : i32
    %c0_i32_0 = arith.constant 0 : i32
    %c0_i32_1 = arith.constant 0 : i32
    return %c0_i32, %c0_i32_0 : i32, i32
  }
  func.func @transform_5(%arg0: i32) -> (i32, i32) {
    %c0_i32 = arith.constant 0 : i32
    %c0_i32_0 = arith.constant 0 : i32
    return %arg0, %c0_i32 : i32, i32
  }
}

</mosaic_0001>

<llo_original>
// kernel: tpu_custom_call.1
$region0: #{tpu_custom_call.1}
  #allocation0 [shape = 'u32[]', space=smem, size = 0x4, offset = 0x4, fixed_abs, tag = 'smem constant byte address 0x4 - core index']
  #allocation1 [shape = 'u32[144,128]{1,0:T(1,128)}', space=vmem, size = 0x12000, scoped, tag = 'internal scratch']
  %s0 = inlined_call_operand.vmem [shape: f32[8,36], index: 0, kind: input, shape index: {}]
  %s1 = inlined_call_operand.hbm [shape: f32[36,1024], index: 1, kind: input, shape index: {}]
  %s2 = inlined_call_operand.vmem [shape: f32[128,128], index: 2, kind: input, shape index: {}]
  %s3 = inlined_call_operand.vmem [shape: f32[128,16], index: 3, kind: input, shape index: {}]
  %s4 = inlined_call_operand.vmem [shape: f32[1,16], index: 4, kind: input, shape index: {}]
  %s5 = inlined_call_operand.hbm [shape: f32[8,16], index: 5, kind: output, shape index: {}]
  %s6 = sld [smem:[#allocation0]]
  $region34: #{tpu_custom_call.1} parent=0
    _
  %s8 = ssub.s32 1, %s6
  %s9 = scalar_select 0, %s8, %s6
  $region1: #{tpu_custom_call.1} parent=0
    #allocation2 [shape = 'u8[163840]{0}', space=vmem, size = 0x28000, scoped, tag = 'input window, operand 1, single buffered']
    #allocation3 [shape = 's32[1]{0}', space=sflag, size = 0x4, scoped, tag = 'scoped memory for tpu_custom_call.1']
    #allocation4 [shape = 's32[1]{0}', space=sflag, size = 0x4, scoped, tag = 'scoped memory for tpu_custom_call.1']
    #allocation5 [shape = 'u8[4096]{0}', space=vmem, size = 0x1000, scoped, tag = 'output window, operand 0, single buffered']
    %10 = vsyncpa [#allocation3], 0
    %11 = vsyncpa [#allocation4], 0
    // Predicated region
    $region2: #{tpu_custom_call.1} parent=1 // pred_check
      _
    $region3: #{tpu_custom_call.1} parent=1 // pred_check_branch
      %13 = sbr.rel (0) target = $region5
    $region4: #{tpu_custom_call.1} parent=1 // pred_region
      _
    $region5: #{tpu_custom_call.1} parent=1 // pred_fallthru
      _
    // Predicated region
    $region6: #{tpu_custom_call.1} parent=1 // pred_check
      _
    $region7: #{tpu_custom_call.1} parent=1 // pred_check_branch
      %15 = sbr.rel (0) target = $region9
    $region8: #{tpu_custom_call.1} parent=1 // pred_region
      %s17 = ssub.s32 5120, 5120
      %18 = vsyncadd [#allocation3], %s17
      %s19 = sshll.u32 [#allocation2], 4
      %s20 = int_to_ptr.vmem [resolvable:$true] %s19
      %25 = dma.hbm_to_vmem [thread:$0]  %s1, 5120, %s20, [#allocation3], 1024, 1024, 64
    $region9: #{tpu_custom_call.1} parent=1 // pred_fallthru
      _
    // Predicated region
    $region10: #{tpu_custom_call.1} parent=1 // pred_check
      _
    $region11: #{tpu_custom_call.1} parent=1 // pred_check_branch
      %27 = sbr.rel (0) target = $region13
    $region12: #{tpu_custom_call.1} parent=1 // pred_region
      _
    $region13: #{tpu_custom_call.1} parent=1 // pred_fallthru
      _
    // Predicated region
    $region14: #{tpu_custom_call.1} parent=1 // pred_check
      _
    $region15: #{tpu_custom_call.1} parent=1 // pred_check_branch
      %29 = sbr.rel (0) target = $region17
    $region16: #{tpu_custom_call.1} parent=1 // pred_region
      _
    $region17: #{tpu_custom_call.1} parent=1 // pred_fallthru
      _
    // Predicated region
    $region18: #{tpu_custom_call.1} parent=1 // pred_check
      _
    $region19: #{tpu_custom_call.1} parent=1 // pred_check_branch
      %31 = sbr.rel (0) target = $region21
    $region20: #{tpu_custom_call.1} parent=1 // pred_region
      _
    $region21: #{tpu_custom_call.1} parent=1 // pred_fallthru
      _
    // Predicated region
    $region22: #{tpu_custom_call.1} parent=1 // pred_check
      _
    $region23: #{tpu_custom_call.1} parent=1 // pred_check_branch
      %33 = sbr.rel (0) target = $region25
    $region24: #{tpu_custom_call.1} parent=1 // pred_region
      %34 = dma.done [#allocation3], 5120
    $region25: #{tpu_custom_call.1} parent=1 // pred_fallthru
      _
    %v35 = vld [vmem:[%s0] sm:$0xff]
    %v36 = vld [vmem:[#allocation2] sm:$0xff]
    %v37 = vld [vmem:[#allocation2 + $0x8] sm:$0xff]
    %v38 = vld [vmem:[#allocation2 + $0x10] sm:$0xff]
    %v39 = vld [vmem:[#allocation2 + $0x18] sm:$0xff]
    %v40 = vld [vmem:[#allocation2 + $0x20] sm:$0xff]
    %v41 = vld [vmem:[#allocation2 + $0x28] sm:$0xff]
    %v42 = vld [vmem:[#allocation2 + $0x30] sm:$0xff]
    %v43 = vld [vmem:[#allocation2 + $0x38] sm:$0xff]
    %v44 = vld [vmem:[#allocation2 + $0x40] sm:$0xff]
    %v45 = vld [vmem:[#allocation2 + $0x48] sm:$0xff]
    %v46 = vld [vmem:[#allocation2 + $0x50] sm:$0xff]
    %v47 = vld [vmem:[#allocation2 + $0x58] sm:$0xff]
    %v48 = vld [vmem:[#allocation2 + $0x60] sm:$0xff]
    %v49 = vld [vmem:[#allocation2 + $0x68] sm:$0xff]
    %v50 = vld [vmem:[#allocation2 + $0x70] sm:$0xff]
    %v51 = vld [vmem:[#allocation2 + $0x78] sm:$0xff]
    %v52 = vld [vmem:[#allocation2 + $0x80] sm:$0xff]
    %v53 = vld [vmem:[#allocation2 + $0x88] sm:$0xff]
    %v54 = vld [vmem:[#allocation2 + $0x90] sm:$0xff]
    %v55 = vld [vmem:[#allocation2 + $0x98] sm:$0xff]
    %v56 = vld [vmem:[#allocation2 + $0xa0] sm:$0xff]
    %v57 = vld [vmem:[#allocation2 + $0xa8] sm:$0xff]
    %v58 = vld [vmem:[#allocation2 + $0xb0] sm:$0xff]
    %v59 = vld [vmem:[#allocation2 + $0xb8] sm:$0xff]
    %v60 = vld [vmem:[#allocation2 + $0xc0] sm:$0xff]
    %v61 = vld [vmem:[#allocation2 + $0xc8] sm:$0xff]
    %v62 = vld [vmem:[#allocation2 + $0xd0] sm:$0xff]
    %v63 = vld [vmem:[#allocation2 + $0xd8] sm:$0xff]
    %v64 = vld [vmem:[#allocation2 + $0xe0] sm:$0xff]
    %v65 = vld [vmem:[#allocation2 + $0xe8] sm:$0xff]
    %v66 = vld [vmem:[#allocation2 + $0xf0] sm:$0xff]
    %v67 = vld [vmem:[#allocation2 + $0xf8] sm:$0xff]
    %v68 = vld [vmem:[#allocation2 + $0x100] sm:$0xf]
    %v69 = vld [vmem:[#allocation2 + $0x108] sm:$0xf]
    %v70 = vld [vmem:[#allocation2 + $0x110] sm:$0xf]
    %v71 = vld [vmem:[#allocation2 + $0x118] sm:$0xf]
    %v72 = vld [vmem:[#allocation2 + $0x120] sm:$0xf]
    %v73 = vld [vmem:[#allocation2 + $0x128] sm:$0xf]
    %v74 = vld [vmem:[#allocation2 + $0x130] sm:$0xf]
    %v75 = vld [vmem:[#allocation2 + $0x138] sm:$0xf]
    %vm76 = vcmask 293888
    %v78 = vsel %vm76, %v35, 0
    %vm80 = vcmask 1043456
    %v82 = vsel %vm80, %v68, 0
    %v85 = vsel %vm80, %v69, 0
    %v88 = vsel %vm80, %v70, 0
    %v91 = vsel %vm80, %v71, 0
    %v94 = vsel %vm80, %v72, 0
    %v97 = vsel %vm80, %v73, 0
    %v100 = vsel %vm80, %v74, 0
    %v103 = vsel %vm80, %v75, 0
    %105 = vmatprep.subr.mxu0 %v37
    %106 = vmatpush1.msra.mxu0 %v36
    %107 = vmatprep.subr.mxu0 %v45
    %108 = vmatpush1.msra.mxu0 %v44
    %109 = vmatprep.subr.mxu0 %v53
    %110 = vmatpush1.msra.mxu0 %v52
    %111 = vmatprep.subr.mxu0 %v61
    %112 = vmatpush1.msra.mxu0 %v60
    %113 = vmatprep.subr.mxu0 %v85
    %114 = vmatpush1.msra.mxu0 %v82
    %115 = vmatprep.subr.mxu0 0.0
    %116 = vmatpush1.msra.mxu0 0.0
    %117 = vmatprep.subr.mxu0 0.0
    %118 = vmatpush1.msra.mxu0 0.0
    %119 = vmatprep.subr.mxu0 0.0
    %120 = vmatpush1.msra.mxu0 0.0
    %121 = vmatprep.subr.mxu0 0.0
    %122 = vmatpush1.msra.mxu0 0.0
    %123 = vmatprep.subr.mxu0 0.0
    %124 = vmatpush1.msra.mxu0 0.0
    %125 = vmatprep.subr.mxu0 0.0
    %126 = vmatpush1.msra.mxu0 0.0
    %127 = vmatprep.subr.mxu0 0.0
    %128 = vmatpush1.msra.mxu0 0.0
    %129 = vmatprep.subr.mxu0 0.0
    %130 = vmatpush1.msra.mxu0 0.0
    %131 = vmatprep.subr.mxu0 0.0
    %132 = vmatpush1.msra.mxu0 0.0
    %133 = vmatprep.subr.mxu0 0.0
    %134 = vmatpush1.msra.mxu0 0.0
    %135 = vmatprep.subr.mxu0 0.0
    %136 = vmatpush1.msra.mxu0 0.0
    %137 = vmatprep.subr.mxu0 0.0
    %138 = vmatpush1.msra.mxu0 0.0
    %139 = vmatprep.subr.mxu0 0.0
    %140 = vmatpush1.msra.mxu0 0.0
    %141 = vmatprep.subr.mxu0 0.0
    %142 = vmatpush1.msra.mxu0 0.0
    %143 = vmatprep.subr.mxu0 0.0
    %144 = vmatpush1.msra.mxu0 0.0
    %145 = vmatprep.subr.mxu0 0.0
    %146 = vmatpush1.msra.mxu0 0.0
    %147 = vmatprep.subr.mxu0 0.0
    %148 = vmatpush1.msra.mxu0 0.0
    %149 = vmatprep.subr.mxu0 0.0
    %150 = vmatpush1.msra.mxu0 0.0
    %151 = vmatprep.subr.mxu0 0.0
    %152 = vmatpush1.msra.mxu0 0.0
    %153 = vmatprep.subr.mxu0 0.0
    %154 = vmatpush1.msra.mxu0 0.0
    %155 = vmatprep.subr.mxu0 0.0
    %156 = vmatpush1.msra.mxu0 0.0
    %157 = vmatprep.subr.mxu0 0.0
    %158 = vmatpush1.msra.mxu0 0.0
    %159 = vmatprep.subr.mxu0 0.0
    %160 = vmatpush1.msra.mxu0 0.0
    %161 = vmatprep.subr.mxu0 0.0
    %162 = vmatpush1.msra.mxu0 0.0
    %163 = vmatprep.subr.mxu0 0.0
    %164 = vmatpush1.msra.mxu0 0.0
    %165 = vmatprep.subr.mxu0 0.0
    %166 = vmatpush1.msra.mxu0 0.0
    %167 = vmatprep.subr.mxu0 0.0
    %168 = vmatpush1.msra.mxu0 0.0
    %169 = vmatprep.mubr.f32.mxu0 0.0
    %170 = vmatmul.mubr.f32.gmra.mrb[0].mxu0 %v78
    %v171 = vpop.f32.mrb[0].mxu0
    %v172 = vadd.f32 0.0, %v171
    %v173 = vpop.f32.mrb[0].mxu0
    %v174 = vadd.f32 0.0, %v173
    %175 = vdwg.mxu0
    %176 = vmatprep.subr.mxu0 %v39
    %177 = vmatpush1.msra.mxu0 %v38
    %178 = vmatprep.subr.mxu0 %v47
    %179 = vmatpush1.msra.mxu0 %v46
    %180 = vmatprep.subr.mxu0 %v55
    %181 = vmatpush1.msra.mxu0 %v54
    %182 = vmatprep.subr.mxu0 %v63
    %183 = vmatpush1.msra.mxu0 %v62
    %184 = vmatprep.subr.mxu0 %v91
    %185 = vmatpush1.msra.mxu0 %v88
    %186 = vmatprep.subr.mxu0 0.0
    %187 = vmatpush1.msra.mxu0 0.0
    %188 = vmatprep.subr.mxu0 0.0
    %189 = vmatpush1.msra.mxu0 0.0
    %190 = vmatprep.subr.mxu0 0.0
    %191 = vmatpush1.msra.mxu0 0.0
    %192 = vmatprep.subr.mxu0 0.0
    %193 = vmatpush1.msra.mxu0 0.0
    %194 = vmatprep.subr.mxu0 0.0
    %195 = vmatpush1.msra.mxu0 0.0
    %196 = vmatprep.subr.mxu0 0.0
    %197 = vmatpush1.msra.mxu0 0.0
    %198 = vmatprep.subr.mxu0 0.0
    %199 = vmatpush1.msra.mxu0 0.0
    %200 = vmatprep.subr.mxu0 0.0
    %201 = vmatpush1.msra.mxu0 0.0
    %202 = vmatprep.subr.mxu0 0.0
    %203 = vmatpush1.msra.mxu0 0.0
    %204 = vmatprep.subr.mxu0 0.0
    %205 = vmatpush1.msra.mxu0 0.0
    %206 = vmatprep.subr.mxu0 0.0
    %207 = vmatpush1.msra.mxu0 0.0
    %208 = vmatprep.subr.mxu0 0.0
    %209 = vmatpush1.msra.mxu0 0.0
    %210 = vmatprep.subr.mxu0 0.0
    %211 = vmatpush1.msra.mxu0 0.0
    %212 = vmatprep.subr.mxu0 0.0
    %213 = vmatpush1.msra.mxu0 0.0
    %214 = vmatprep.subr.mxu0 0.0
    %215 = vmatpush1.msra.mxu0 0.0
    %216 = vmatprep.subr.mxu0 0.0
    %217 = vmatpush1.msra.mxu0 0.0
    %218 = vmatprep.subr.mxu0 0.0
    %219 = vmatpush1.msra.mxu0 0.0
    %220 = vmatprep.subr.mxu0 0.0
    %221 = vmatpush1.msra.mxu0 0.0
    %222 = vmatprep.subr.mxu0 0.0
    %223 = vmatpush1.msra.mxu0 0.0
    %224 = vmatprep.subr.mxu0 0.0
    %225 = vmatpush1.msra.mxu0 0.0
    %226 = vmatprep.subr.mxu0 0.0
    %227 = vmatpush1.msra.mxu0 0.0
    %228 = vmatprep.subr.mxu0 0.0
    %229 = vmatpush1.msra.mxu0 0.0
    %230 = vmatprep.subr.mxu0 0.0
    %231 = vmatpush1.msra.mxu0 0.0
    %232 = vmatprep.subr.mxu0 0.0
    %233 = vmatpush1.msra.mxu0 0.0
    %234 = vmatprep.subr.mxu0 0.0
    %235 = vmatpush1.msra.mxu0 0.0
    %236 = vmatprep.subr.mxu0 0.0
    %237 = vmatpush1.msra.mxu0 0.0
    %238 = vmatprep.subr.mxu0 0.0
    %239 = vmatpush1.msra.mxu0 0.0
    %240 = vmatprep.mubr.f32.mxu0 0.0
    %241 = vmatmul.mubr.f32.gmra.mrb[0].mxu0 %v78
    %v242 = vpop.f32.mrb[0].mxu0
    %v243 = vadd.f32 0.0, %v242
    %v244 = vpop.f32.mrb[0].mxu0
    %v245 = vadd.f32 0.0, %v244
    %246 = vdwg.mxu0
    %247 = vmatprep.subr.mxu0 %v41
    %248 = vmatpush1.msra.mxu0 %v40
    %249 = vmatprep.subr.mxu0 %v49
    %250 = vmatpush1.msra.mxu0 %v48
    %251 = vmatprep.subr.mxu0 %v57
    %252 = vmatpush1.msra.mxu0 %v56
    %253 = vmatprep.subr.mxu0 %v65
    %254 = vmatpush1.msra.mxu0 %v64
    %255 = vmatprep.subr.mxu0 %v97
    %256 = vmatpush1.msra.mxu0 %v94
    %257 = vmatprep.subr.mxu0 0.0
    %258 = vmatpush1.msra.mxu0 0.0
    %259 = vmatprep.subr.mxu0 0.0
    %260 = vmatpush1.msra.mxu0 0.0
    %261 = vmatprep.subr.mxu0 0.0
    %262 = vmatpush1.msra.mxu0 0.0
    %263 = vmatprep.subr.mxu0 0.0
    %264 = vmatpush1.msra.mxu0 0.0
    %265 = vmatprep.subr.mxu0 0.0
    %266 = vmatpush1.msra.mxu0 0.0
    %267 = vmatprep.subr.mxu0 0.0
    %268 = vmatpush1.msra.mxu0 0.0
    %269 = vmatprep.subr.mxu0 0.0
    %270 = vmatpush1.msra.mxu0 0.0
    %271 = vmatprep.subr.mxu0 0.0
    %272 = vmatpush1.msra.mxu0 0.0
    %273 = vmatprep.subr.mxu0 0.0
    %274 = vmatpush1.msra.mxu0 0.0
    %275 = vmatprep.subr.mxu0 0.0
    %276 = vmatpush1.msra.mxu0 0.0
    %277 = vmatprep.subr.mxu0 0.0
    %278 = vmatpush1.msra.mxu0 0.0
    %279 = vmatprep.subr.mxu0 0.0
    %280 = vmatpush1.msra.mxu0 0.0
    %281 = vmatprep.subr.mxu0 0.0
    %282 = vmatpush1.msra.mxu0 0.0
    %283 = vmatprep.subr.mxu0 0.0
    %284 = vmatpush1.msra.mxu0 0.0
    %285 = vmatprep.subr.mxu0 0.0
    %286 = vmatpush1.msra.mxu0 0.0
    %287 = vmatprep.subr.mxu0 0.0
    %288 = vmatpush1.msra.mxu0 0.0
    %289 = vmatprep.subr.mxu0 0.0
    %290 = vmatpush1.msra.mxu0 0.0
    %291 = vmatprep.subr.mxu0 0.0
    %292 = vmatpush1.msra.mxu0 0.0
    %293 = vmatprep.subr.mxu0 0.0
    %294 = vmatpush1.msra.mxu0 0.0
    %295 = vmatprep.subr.mxu0 0.0
    %296 = vmatpush1.msra.mxu0 0.0
    %297 = vmatprep.subr.mxu0 0.0
    %298 = vmatpush1.msra.mxu0 0.0
    %299 = vmatprep.subr.mxu0 0.0
    %300 = vmatpush1.msra.mxu0 0.0
    %301 = vmatprep.subr.mxu0 0.0
    %302 = vmatpush1.msra.mxu0 0.0
    %303 = vmatprep.subr.mxu0 0.0
    %304 = vmatpush1.msra.mxu0 0.0
    %305 = vmatprep.subr.mxu0 0.0
    %306 = vmatpush1.msra.mxu0 0.0
    %307 = vmatprep.subr.mxu0 0.0
    %308 = vmatpush1.msra.mxu0 0.0
    %309 = vmatprep.subr.mxu0 0.0
    %310 = vmatpush1.msra.mxu0 0.0
    %311 = vmatprep.mubr.f32.mxu0 0.0
    %312 = vmatmul.mubr.f32.gmra.mrb[0].mxu0 %v78
    %v313 = vpop.f32.mrb[0].mxu0
    %v314 = vadd.f32 0.0, %v313
    %v315 = vpop.f32.mrb[0].mxu0
    %v316 = vadd.f32 0.0, %v315
    %317 = vdwg.mxu0
    %318 = vmatprep.subr.mxu0 %v43
    %319 = vmatpush1.msra.mxu0 %v42
    %320 = vmatprep.subr.mxu0 %v51
    %321 = vmatpush1.msra.mxu0 %v50
    %322 = vmatprep.subr.mxu0 %v59
    %323 = vmatpush1.msra.mxu0 %v58
    %324 = vmatprep.subr.mxu0 %v67
    %325 = vmatpush1.msra.mxu0 %v66
    %326 = vmatprep.subr.mxu0 %v103
    %327 = vmatpush1.msra.mxu0 %v100
    %328 = vmatprep.subr.mxu0 0.0
    %329 = vmatpush1.msra.mxu0 0.0
    %330 = vmatprep.subr.mxu0 0.0
    %331 = vmatpush1.msra.mxu0 0.0
    %332 = vmatprep.subr.mxu0 0.0
    %333 = vmatpush1.msra.mxu0 0.0
    %334 = vmatprep.subr.mxu0 0.0
    %335 = vmatpush1.msra.mxu0 0.0
    %336 = vmatprep.subr.mxu0 0.0
    %337 = vmatpush1.msra.mxu0 0.0
    %338 = vmatprep.subr.mxu0 0.0
    %339 = vmatpush1.msra.mxu0 0.0
    %340 = vmatprep.subr.mxu0 0.0
    %341 = vmatpush1.msra.mxu0 0.0
    %342 = vmatprep.subr.mxu0 0.0
    %343 = vmatpush1.msra.mxu0 0.0
    %344 = vmatprep.subr.mxu0 0.0
    %345 = vmatpush1.msra.mxu0 0.0
    %346 = vmatprep.subr.mxu0 0.0
    %347 = vmatpush1.msra.mxu0 0.0
    %348 = vmatprep.subr.mxu0 0.0
    %349 = vmatpush1.msra.mxu0 0.0
    %350 = vmatprep.subr.mxu0 0.0
    %351 = vmatpush1.msra.mxu0 0.0
    %352 = vmatprep.subr.mxu0 0.0
    %353 = vmatpush1.msra.mxu0 0.0
    %354 = vmatprep.subr.mxu0 0.0
    %355 = vmatpush1.msra.mxu0 0.0
    %356 = vmatprep.subr.mxu0 0.0
    %357 = vmatpush1.msra.mxu0 0.0
    %358 = vmatprep.subr.mxu0 0.0
    %359 = vmatpush1.msra.mxu0 0.0
    %360 = vmatprep.subr.mxu0 0.0
    %361 = vmatpush1.msra.mxu0 0.0
    %362 = vmatprep.subr.mxu0 0.0
    %363 = vmatpush1.msra.mxu0 0.0
    %364 = vmatprep.subr.mxu0 0.0
    %365 = vmatpush1.msra.mxu0 0.0
    %366 = vmatprep.subr.mxu0 0.0
    %367 = vmatpush1.msra.mxu0 0.0
    %368 = vmatprep.subr.mxu0 0.0
    %369 = vmatpush1.msra.mxu0 0.0
    %370 = vmatprep.subr.mxu0 0.0
    %371 = vmatpush1.msra.mxu0 0.0
    %372 = vmatprep.subr.mxu0 0.0
    %373 = vmatpush1.msra.mxu0 0.0
    %374 = vmatprep.subr.mxu0 0.0
    %375 = vmatpush1.msra.mxu0 0.0
    %376 = vmatprep.subr.mxu0 0.0
    %377 = vmatpush1.msra.mxu0 0.0
    %378 = vmatprep.subr.mxu0 0.0
    %379 = vmatpush1.msra.mxu0 0.0
    %380 = vmatprep.subr.mxu0 0.0
    %381 = vmatpush1.msra.mxu0 0.0
    %382 = vmatprep.mubr.f32.mxu0 0.0
    %383 = vmatmul.mubr.f32.gmra.mrb[0].mxu0 %v78
    %v384 = vpop.f32.mrb[0].mxu0
    %v385 = vadd.f32 0.0, %v384
    %v386 = vpop.f32.mrb[0].mxu0
    %v387 = vadd.f32 0.0, %v386
    %388 = vdwg.mxu0
    %v389 = vld [vmem:[%s2] sm:$0xff]
    %v390 = vld [vmem:[%s2 + $0x8] sm:$0xff]
    %v391 = vld [vmem:[%s2 + $0x10] sm:$0xff]
    %v392 = vld [vmem:[%s2 + $0x18] sm:$0xff]
    %v393 = vld [vmem:[%s2 + $0x20] sm:$0xff]
    %v394 = vld [vmem:[%s2 + $0x28] sm:$0xff]
    %v395 = vld [vmem:[%s2 + $0x30] sm:$0xff]
    %v396 = vld [vmem:[%s2 + $0x38] sm:$0xff]
    %v397 = vld [vmem:[%s2 + $0x40] sm:$0xff]
    %v398 = vld [vmem:[%s2 + $0x48] sm:$0xff]
    %v399 = vld [vmem:[%s2 + $0x50] sm:$0xff]
    %v400 = vld [vmem:[%s2 + $0x58] sm:$0xff]
    %v401 = vld [vmem:[%s2 + $0x60] sm:$0xff]
    %v402 = vld [vmem:[%s2 + $0x68] sm:$0xff]
    %v403 = vld [vmem:[%s2 + $0x70] sm:$0xff]
    %v404 = vld [vmem:[%s2 + $0x78] sm:$0xff]
    %v405 = vmax.f32 %v172, 0.0
    %406 = vmatprep.subr.mxu0 0.0
    %407 = vmatpush1.msra.mxu0 %v389
    %408 = vmatprep.subr.mxu0 0.0
    %409 = vmatpush1.msra.mxu0 %v390
    %410 = vmatprep.subr.mxu0 0.0
    %411 = vmatpush1.msra.mxu0 %v391
    %412 = vmatprep.subr.mxu0 0.0
    %413 = vmatpush1.msra.mxu0 %v392
    %414 = vmatprep.subr.mxu0 0.0
    %415 = vmatpush1.msra.mxu0 %v393
    %416 = vmatprep.subr.mxu0 0.0
    %417 = vmatpush1.msra.mxu0 %v394
    %418 = vmatprep.subr.mxu0 0.0
    %419 = vmatpush1.msra.mxu0 %v395
    %420 = vmatprep.subr.mxu0 0.0
    %421 = vmatpush1.msra.mxu0 %v396
    %422 = vmatprep.subr.mxu0 0.0
    %423 = vmatpush1.msra.mxu0 %v397
    %424 = vmatprep.subr.mxu0 0.0
    %425 = vmatpush1.msra.mxu0 %v398
    %426 = vmatprep.subr.mxu0 0.0
    %427 = vmatpush1.msra.mxu0 %v399
    %428 = vmatprep.subr.mxu0 0.0
    %429 = vmatpush1.msra.mxu0 %v400
    %430 = vmatprep.subr.mxu0 0.0
    %431 = vmatpush1.msra.mxu0 %v401
    %432 = vmatprep.subr.mxu0 0.0
    %433 = vmatpush1.msra.mxu0 %v402
    %434 = vmatprep.subr.mxu0 0.0
    %435 = vmatpush1.msra.mxu0 %v403
    %436 = vmatprep.subr.mxu0 0.0
    %437 = vmatpush1.msra.mxu0 %v404
    %438 = vmatprep.subr.mxu0 0.0
    %439 = vmatpush1.msra.mxu0 0.0
    %440 = vmatprep.subr.mxu0 0.0
    %441 = vmatpush1.msra.mxu0 0.0
    %442 = vmatprep.subr.mxu0 0.0
    %443 = vmatpush1.msra.mxu0 0.0
    %444 = vmatprep.subr.mxu0 0.0
    %445 = vmatpush1.msra.mxu0 0.0
    %446 = vmatprep.subr.mxu0 0.0
    %447 = vmatpush1.msra.mxu0 0.0
    %448 = vmatprep.subr.mxu0 0.0
    %449 = vmatpush1.msra.mxu0 0.0
    %450 = vmatprep.subr.mxu0 0.0
    %451 = vmatpush1.msra.mxu0 0.0
    %452 = vmatprep.subr.mxu0 0.0
    %453 = vmatpush1.msra.mxu0 0.0
    %454 = vmatprep.subr.mxu0 0.0
    %455 = vmatpush1.msra.mxu0 0.0
    %456 = vmatprep.subr.mxu0 0.0
    %457 = vmatpush1.msra.mxu0 0.0
    %458 = vmatprep.subr.mxu0 0.0
    %459 = vmatpush1.msra.mxu0 0.0
    %460 = vmatprep.subr.mxu0 0.0
    %461 = vmatpush1.msra.mxu0 0.0
    %462 = vmatprep.subr.mxu0 0.0
    %463 = vmatpush1.msra.mxu0 0.0
    %464 = vmatprep.subr.mxu0 0.0
    %465 = vmatpush1.msra.mxu0 0.0
    %466 = vmatprep.subr.mxu0 0.0
    %467 = vmatpush1.msra.mxu0 0.0
    %468 = vmatprep.subr.mxu0 0.0
    %469 = vmatpush1.msra.mxu0 0.0
    %470 = vmatprep.mubr.f32.mxu0 0.0
    %471 = vmatmul.mubr.f32.gmra.mrb[0].mxu0 %v405
    %v472 = vpop.f32.mrb[0].mxu0
    %v473 = vadd.f32 0.0, %v472
    %v474 = vpop.f32.mrb[0].mxu0
    %475 = vdwg.mxu0
    %v476 = vadd.f32 %v174, %v473
    %v477 = vmax.f32 %v476, 0.0
    %478 = vmatprep.subr.mxu0 0.0
    %479 = vmatpush1.msra.mxu0 %v389
    %480 = vmatprep.subr.mxu0 0.0
    %481 = vmatpush1.msra.mxu0 %v390
    %482 = vmatprep.subr.mxu0 0.0
    %483 = vmatpush1.msra.mxu0 %v391
    %484 = vmatprep.subr.mxu0 0.0
    %485 = vmatpush1.msra.mxu0 %v392
    %486 = vmatprep.subr.mxu0 0.0
    %487 = vmatpush1.msra.mxu0 %v393
    %488 = vmatprep.subr.mxu0 0.0
    %489 = vmatpush1.msra.mxu0 %v394
    %490 = vmatprep.subr.mxu0 0.0
    %491 = vmatpush1.msra.mxu0 %v395
    %492 = vmatprep.subr.mxu0 0.0
    %493 = vmatpush1.msra.mxu0 %v396
    %494 = vmatprep.subr.mxu0 0.0
    %495 = vmatpush1.msra.mxu0 %v397
    %496 = vmatprep.subr.mxu0 0.0
    %497 = vmatpush1.msra.mxu0 %v398
    %498 = vmatprep.subr.mxu0 0.0
    %499 = vmatpush1.msra.mxu0 %v399
    %500 = vmatprep.subr.mxu0 0.0
    %501 = vmatpush1.msra.mxu0 %v400
    %502 = vmatprep.subr.mxu0 0.0
    %503 = vmatpush1.msra.mxu0 %v401
    %504 = vmatprep.subr.mxu0 0.0
    %505 = vmatpush1.msra.mxu0 %v402
    %506 = vmatprep.subr.mxu0 0.0
    %507 = vmatpush1.msra.mxu0 %v403
    %508 = vmatprep.subr.mxu0 0.0
    %509 = vmatpush1.msra.mxu0 %v404
    %510 = vmatprep.subr.mxu0 0.0
    %511 = vmatpush1.msra.mxu0 0.0
    %512 = vmatprep.subr.mxu0 0.0
    %513 = vmatpush1.msra.mxu0 0.0
    %514 = vmatprep.subr.mxu0 0.0
    %515 = vmatpush1.msra.mxu0 0.0
    %516 = vmatprep.subr.mxu0 0.0
    %517 = vmatpush1.msra.mxu0 0.0
    %518 = vmatprep.subr.mxu0 0.0
    %519 = vmatpush1.msra.mxu0 0.0
    %520 = vmatprep.subr.mxu0 0.0
    %521 = vmatpush1.msra.mxu0 0.0
    %522 = vmatprep.subr.mxu0 0.0
    %523 = vmatpush1.msra.mxu0 0.0
    %524 = vmatprep.subr.mxu0 0.0
    %525 = vmatpush1.msra.mxu0 0.0
    %526 = vmatprep.subr.mxu0 0.0
    %527 = vmatpush1.msra.mxu0 0.0
    %528 = vmatprep.subr.mxu0 0.0
    %529 = vmatpush1.msra.mxu0 0.0
    %530 = vmatprep.subr.mxu0 0.0
    %531 = vmatpush1.msra.mxu0 0.0
    %532 = vmatprep.subr.mxu0 0.0
    %533 = vmatpush1.msra.mxu0 0.0
    %534 = vmatprep.subr.mxu0 0.0
    %535 = vmatpush1.msra.mxu0 0.0
    %536 = vmatprep.subr.mxu0 0.0
    %537 = vmatpush1.msra.mxu0 0.0
    %538 = vmatprep.subr.mxu0 0.0
    %539 = vmatpush1.msra.mxu0 0.0
    %540 = vmatprep.subr.mxu0 0.0
    %541 = vmatpush1.msra.mxu0 0.0
    %542 = vmatprep.mubr.f32.mxu0 0.0
    %543 = vmatmul.mubr.f32.gmra.mrb[0].mxu0 %v477
    %v544 = vpop.f32.mrb[0].mxu0
    %v545 = vadd.f32 0.0, %v544
    %v546 = vpop.f32.mrb[0].mxu0
    %547 = vdwg.mxu0
    %v548 = vadd.f32 %v243, %v545
    %v549 = vmax.f32 %v548, 0.0
    %550 = vmatprep.subr.mxu0 0.0
    %551 = vmatpush1.msra.mxu0 %v389
    %552 = vmatprep.subr.mxu0 0.0
    %553 = vmatpush1.msra.mxu0 %v390
    %554 = vmatprep.subr.mxu0 0.0
    %555 = vmatpush1.msra.mxu0 %v391
    %556 = vmatprep.subr.mxu0 0.0
    %557 = vmatpush1.msra.mxu0 %v392
    %558 = vmatprep.subr.mxu0 0.0
    %559 = vmatpush1.msra.mxu0 %v393
    %560 = vmatprep.subr.mxu0 0.0
    %561 = vmatpush1.msra.mxu0 %v394
    %562 = vmatprep.subr.mxu0 0.0
    %563 = vmatpush1.msra.mxu0 %v395
    %564 = vmatprep.subr.mxu0 0.0
    %565 = vmatpush1.msra.mxu0 %v396
    %566 = vmatprep.subr.mxu0 0.0
    %567 = vmatpush1.msra.mxu0 %v397
    %568 = vmatprep.subr.mxu0 0.0
    %569 = vmatpush1.msra.mxu0 %v398
    %570 = vmatprep.subr.mxu0 0.0
    %571 = vmatpush1.msra.mxu0 %v399
    %572 = vmatprep.subr.mxu0 0.0
    %573 = vmatpush1.msra.mxu0 %v400
    %574 = vmatprep.subr.mxu0 0.0
    %575 = vmatpush1.msra.mxu0 %v401
    %576 = vmatprep.subr.mxu0 0.0
    %577 = vmatpush1.msra.mxu0 %v402
    %578 = vmatprep.subr.mxu0 0.0
    %579 = vmatpush1.msra.mxu0 %v403
    %580 = vmatprep.subr.mxu0 0.0
    %581 = vmatpush1.msra.mxu0 %v404
    %582 = vmatprep.subr.mxu0 0.0
    %583 = vmatpush1.msra.mxu0 0.0
    %584 = vmatprep.subr.mxu0 0.0
    %585 = vmatpush1.msra.mxu0 0.0
    %586 = vmatprep.subr.mxu0 0.0
    %587 = vmatpush1.msra.mxu0 0.0
    %588 = vmatprep.subr.mxu0 0.0
    %589 = vmatpush1.msra.mxu0 0.0
    %590 = vmatprep.subr.mxu0 0.0
    %591 = vmatpush1.msra.mxu0 0.0
    %592 = vmatprep.subr.mxu0 0.0
    %593 = vmatpush1.msra.mxu0 0.0
    %594 = vmatprep.subr.mxu0 0.0
    %595 = vmatpush1.msra.mxu0 0.0
    %596 = vmatprep.subr.mxu0 0.0
    %597 = vmatpush1.msra.mxu0 0.0
    %598 = vmatprep.subr.mxu0 0.0
    %599 = vmatpush1.msra.mxu0 0.0
    %600 = vmatprep.subr.mxu0 0.0
    %601 = vmatpush1.msra.mxu0 0.0
    %602 = vmatprep.subr.mxu0 0.0
    %603 = vmatpush1.msra.mxu0 0.0
    %604 = vmatprep.subr.mxu0 0.0
    %605 = vmatpush1.msra.mxu0 0.0
    %606 = vmatprep.subr.mxu0 0.0
    %607 = vmatpush1.msra.mxu0 0.0
    %608 = vmatprep.subr.mxu0 0.0
    %609 = vmatpush1.msra.mxu0 0.0
    %610 = vmatprep.subr.mxu0 0.0
    %611 = vmatpush1.msra.mxu0 0.0
    %612 = vmatprep.subr.mxu0 0.0
    %613 = vmatpush1.msra.mxu0 0.0
    %614 = vmatprep.mubr.f32.mxu0 0.0
    %615 = vmatmul.mubr.f32.gmra.mrb[0].mxu0 %v549
    %v616 = vpop.f32.mrb[0].mxu0
    %v617 = vadd.f32 0.0, %v616
    %v618 = vpop.f32.mrb[0].mxu0
    %619 = vdwg.mxu0
    %v620 = vadd.f32 %v245, %v617
    %v621 = vmax.f32 %v620, 0.0
    %622 = vmatprep.subr.mxu0 0.0
    %623 = vmatpush1.msra.mxu0 %v389
    %624 = vmatprep.subr.mxu0 0.0
    %625 = vmatpush1.msra.mxu0 %v390
    %626 = vmatprep.subr.mxu0 0.0
    %627 = vmatpush1.msra.mxu0 %v391
    %628 = vmatprep.subr.mxu0 0.0
    %629 = vmatpush1.msra.mxu0 %v392
    %630 = vmatprep.subr.mxu0 0.0
    %631 = vmatpush1.msra.mxu0 %v393
    %632 = vmatprep.subr.mxu0 0.0
    %633 = vmatpush1.msra.mxu0 %v394
    %634 = vmatprep.subr.mxu0 0.0
    %635 = vmatpush1.msra.mxu0 %v395
    %636 = vmatprep.subr.mxu0 0.0
    %637 = vmatpush1.msra.mxu0 %v396
    %638 = vmatprep.subr.mxu0 0.0
    %639 = vmatpush1.msra.mxu0 %v397
    %640 = vmatprep.subr.mxu0 0.0
    %641 = vmatpush1.msra.mxu0 %v398
    %642 = vmatprep.subr.mxu0 0.0
    %643 = vmatpush1.msra.mxu0 %v399
    %644 = vmatprep.subr.mxu0 0.0
    %645 = vmatpush1.msra.mxu0 %v400
    %646 = vmatprep.subr.mxu0 0.0
    %647 = vmatpush1.msra.mxu0 %v401
    %648 = vmatprep.subr.mxu0 0.0
    %649 = vmatpush1.msra.mxu0 %v402
    %650 = vmatprep.subr.mxu0 0.0
    %651 = vmatpush1.msra.mxu0 %v403
    %652 = vmatprep.subr.mxu0 0.0
    %653 = vmatpush1.msra.mxu0 %v404
    %654 = vmatprep.subr.mxu0 0.0
    %655 = vmatpush1.msra.mxu0 0.0
    %656 = vmatprep.subr.mxu0 0.0
    %657 = vmatpush1.msra.mxu0 0.0
    %658 = vmatprep.subr.mxu0 0.0
    %659 = vmatpush1.msra.mxu0 0.0
    %660 = vmatprep.subr.mxu0 0.0
    %661 = vmatpush1.msra.mxu0 0.0
    %662 = vmatprep.subr.mxu0 0.0
    %663 = vmatpush1.msra.mxu0 0.0
    %664 = vmatprep.subr.mxu0 0.0
    %665 = vmatpush1.msra.mxu0 0.0
    %666 = vmatprep.subr.mxu0 0.0
    %667 = vmatpush1.msra.mxu0 0.0
    %668 = vmatprep.subr.mxu0 0.0
    %669 = vmatpush1.msra.mxu0 0.0
    %670 = vmatprep.subr.mxu0 0.0
    %671 = vmatpush1.msra.mxu0 0.0
    %672 = vmatprep.subr.mxu0 0.0
    %673 = vmatpush1.msra.mxu0 0.0
    %674 = vmatprep.subr.mxu0 0.0
    %675 = vmatpush1.msra.mxu0 0.0
    %676 = vmatprep.subr.mxu0 0.0
    %677 = vmatpush1.msra.mxu0 0.0
    %678 = vmatprep.subr.mxu0 0.0
    %679 = vmatpush1.msra.mxu0 0.0
    %680 = vmatprep.subr.mxu0 0.0
    %681 = vmatpush1.msra.mxu0 0.0
    %682 = vmatprep.subr.mxu0 0.0
    %683 = vmatpush1.msra.mxu0 0.0
    %684 = vmatprep.subr.mxu0 0.0
    %685 = vmatpush1.msra.mxu0 0.0
    %686 = vmatprep.mubr.f32.mxu0 0.0
    %687 = vmatmul.mubr.f32.gmra.mrb[0].mxu0 %v621
    %v688 = vpop.f32.mrb[0].mxu0
    %v689 = vadd.f32 0.0, %v688
    %v690 = vpop.f32.mrb[0].mxu0
    %691 = vdwg.mxu0
    %v692 = vadd.f32 %v314, %v689
    %v693 = vmax.f32 %v692, 0.0
    %694 = vmatprep.subr.mxu0 0.0
    %695 = vmatpush1.msra.mxu0 %v389
    %696 = vmatprep.subr.mxu0 0.0
    %697 = vmatpush1.msra.mxu0 %v390
    %698 = vmatprep.subr.mxu0 0.0
    %699 = vmatpush1.msra.mxu0 %v391
    %700 = vmatprep.subr.mxu0 0.0
    %701 = vmatpush1.msra.mxu0 %v392
    %702 = vmatprep.subr.mxu0 0.0
    %703 = vmatpush1.msra.mxu0 %v393
    %704 = vmatprep.subr.mxu0 0.0
    %705 = vmatpush1.msra.mxu0 %v394
    %706 = vmatprep.subr.mxu0 0.0
    %707 = vmatpush1.msra.mxu0 %v395
    %708 = vmatprep.subr.mxu0 0.0
    %709 = vmatpush1.msra.mxu0 %v396
    %710 = vmatprep.subr.mxu0 0.0
    %711 = vmatpush1.msra.mxu0 %v397
    %712 = vmatprep.subr.mxu0 0.0
    %713 = vmatpush1.msra.mxu0 %v398
    %714 = vmatprep.subr.mxu0 0.0
    %715 = vmatpush1.msra.mxu0 %v399
    %716 = vmatprep.subr.mxu0 0.0
    %717 = vmatpush1.msra.mxu0 %v400
    %718 = vmatprep.subr.mxu0 0.0
    %719 = vmatpush1.msra.mxu0 %v401
    %720 = vmatprep.subr.mxu0 0.0
    %721 = vmatpush1.msra.mxu0 %v402
    %722 = vmatprep.subr.mxu0 0.0
    %723 = vmatpush1.msra.mxu0 %v403
    %724 = vmatprep.subr.mxu0 0.0
    %725 = vmatpush1.msra.mxu0 %v404
    %726 = vmatprep.subr.mxu0 0.0
    %727 = vmatpush1.msra.mxu0 0.0
    %728 = vmatprep.subr.mxu0 0.0
    %729 = vmatpush1.msra.mxu0 0.0
    %730 = vmatprep.subr.mxu0 0.0
    %731 = vmatpush1.msra.mxu0 0.0
    %732 = vmatprep.subr.mxu0 0.0
    %733 = vmatpush1.msra.mxu0 0.0
    %734 = vmatprep.subr.mxu0 0.0
    %735 = vmatpush1.msra.mxu0 0.0
    %736 = vmatprep.subr.mxu0 0.0
    %737 = vmatpush1.msra.mxu0 0.0
    %738 = vmatprep.subr.mxu0 0.0
    %739 = vmatpush1.msra.mxu0 0.0
    %740 = vmatprep.subr.mxu0 0.0
    %741 = vmatpush1.msra.mxu0 0.0
    %742 = vmatprep.subr.mxu0 0.0
    %743 = vmatpush1.msra.mxu0 0.0
    %744 = vmatprep.subr.mxu0 0.0
    %745 = vmatpush1.msra.mxu0 0.0
    %746 = vmatprep.subr.mxu0 0.0
    %747 = vmatpush1.msra.mxu0 0.0
    %748 = vmatprep.subr.mxu0 0.0
    %749 = vmatpush1.msra.mxu0 0.0
    %750 = vmatprep.subr.mxu0 0.0
    %751 = vmatpush1.msra.mxu0 0.0
    %752 = vmatprep.subr.mxu0 0.0
    %753 = vmatpush1.msra.mxu0 0.0
    %754 = vmatprep.subr.mxu0 0.0
    %755 = vmatpush1.msra.mxu0 0.0
    %756 = vmatprep.subr.mxu0 0.0
    %757 = vmatpush1.msra.mxu0 0.0
    %758 = vmatprep.mubr.f32.mxu0 0.0
    %759 = vmatmul.mubr.f32.gmra.mrb[0].mxu0 %v693
    %v760 = vpop.f32.mrb[0].mxu0
    %v761 = vadd.f32 0.0, %v760
    %v762 = vpop.f32.mrb[0].mxu0
    %763 = vdwg.mxu0
    %v764 = vadd.f32 %v316, %v761
    %v765 = vmax.f32 %v764, 0.0
    %766 = vmatprep.subr.mxu0 0.0
    %767 = vmatpush1.msra.mxu0 %v389
    %768 = vmatprep.subr.mxu0 0.0
    %769 = vmatpush1.msra.mxu0 %v390
    %770 = vmatprep.subr.mxu0 0.0
    %771 = vmatpush1.msra.mxu0 %v391
    %772 = vmatprep.subr.mxu0 0.0
    %773 = vmatpush1.msra.mxu0 %v392
    %774 = vmatprep.subr.mxu0 0.0
    %775 = vmatpush1.msra.mxu0 %v393
    %776 = vmatprep.subr.mxu0 0.0
    %777 = vmatpush1.msra.mxu0 %v394
    %778 = vmatprep.subr.mxu0 0.0
    %779 = vmatpush1.msra.mxu0 %v395
    %780 = vmatprep.subr.mxu0 0.0
    %781 = vmatpush1.msra.mxu0 %v396
    %782 = vmatprep.subr.mxu0 0.0
    %783 = vmatpush1.msra.mxu0 %v397
    %784 = vmatprep.subr.mxu0 0.0
    %785 = vmatpush1.msra.mxu0 %v398
    %786 = vmatprep.subr.mxu0 0.0
    %787 = vmatpush1.msra.mxu0 %v399
    %788 = vmatprep.subr.mxu0 0.0
    %789 = vmatpush1.msra.mxu0 %v400
    %790 = vmatprep.subr.mxu0 0.0
    %791 = vmatpush1.msra.mxu0 %v401
    %792 = vmatprep.subr.mxu0 0.0
    %793 = vmatpush1.msra.mxu0 %v402
    %794 = vmatprep.subr.mxu0 0.0
    %795 = vmatpush1.msra.mxu0 %v403
    %796 = vmatprep.subr.mxu0 0.0
    %797 = vmatpush1.msra.mxu0 %v404
    %798 = vmatprep.subr.mxu0 0.0
    %799 = vmatpush1.msra.mxu0 0.0
    %800 = vmatprep.subr.mxu0 0.0
    %801 = vmatpush1.msra.mxu0 0.0
    %802 = vmatprep.subr.mxu0 0.0
    %803 = vmatpush1.msra.mxu0 0.0
    %804 = vmatprep.subr.mxu0 0.0
    %805 = vmatpush1.msra.mxu0 0.0
    %806 = vmatprep.subr.mxu0 0.0
    %807 = vmatpush1.msra.mxu0 0.0
    %808 = vmatprep.subr.mxu0 0.0
    %809 = vmatpush1.msra.mxu0 0.0
    %810 = vmatprep.subr.mxu0 0.0
    %811 = vmatpush1.msra.mxu0 0.0
    %812 = vmatprep.subr.mxu0 0.0
    %813 = vmatpush1.msra.mxu0 0.0
    %814 = vmatprep.subr.mxu0 0.0
    %815 = vmatpush1.msra.mxu0 0.0
    %816 = vmatprep.subr.mxu0 0.0
    %817 = vmatpush1.msra.mxu0 0.0
    %818 = vmatprep.subr.mxu0 0.0
    %819 = vmatpush1.msra.mxu0 0.0
    %820 = vmatprep.subr.mxu0 0.0
    %821 = vmatpush1.msra.mxu0 0.0
    %822 = vmatprep.subr.mxu0 0.0
    %823 = vmatpush1.msra.mxu0 0.0
    %824 = vmatprep.subr.mxu0 0.0
    %825 = vmatpush1.msra.mxu0 0.0
    %826 = vmatprep.subr.mxu0 0.0
    %827 = vmatpush1.msra.mxu0 0.0
    %828 = vmatprep.subr.mxu0 0.0
    %829 = vmatpush1.msra.mxu0 0.0
    %830 = vmatprep.mubr.f32.mxu0 0.0
    %831 = vmatmul.mubr.f32.gmra.mrb[0].mxu0 %v765
    %v832 = vpop.f32.mrb[0].mxu0
    %v833 = vadd.f32 0.0, %v832
    %v834 = vpop.f32.mrb[0].mxu0
    %835 = vdwg.mxu0
    %v836 = vadd.f32 %v385, %v833
    %v837 = vmax.f32 %v836, 0.0
    %838 = vmatprep.subr.mxu0 0.0
    %839 = vmatpush1.msra.mxu0 %v389
    %840 = vmatprep.subr.mxu0 0.0
    %841 = vmatpush1.msra.mxu0 %v390
    %842 = vmatprep.subr.mxu0 0.0
    %843 = vmatpush1.msra.mxu0 %v391
    %844 = vmatprep.subr.mxu0 0.0
    %845 = vmatpush1.msra.mxu0 %v392
    %846 = vmatprep.subr.mxu0 0.0
    %847 = vmatpush1.msra.mxu0 %v393
    %848 = vmatprep.subr.mxu0 0.0
    %849 = vmatpush1.msra.mxu0 %v394
    %850 = vmatprep.subr.mxu0 0.0
    %851 = vmatpush1.msra.mxu0 %v395
    %852 = vmatprep.subr.mxu0 0.0
    %853 = vmatpush1.msra.mxu0 %v396
    %854 = vmatprep.subr.mxu0 0.0
    %855 = vmatpush1.msra.mxu0 %v397
    %856 = vmatprep.subr.mxu0 0.0
    %857 = vmatpush1.msra.mxu0 %v398
    %858 = vmatprep.subr.mxu0 0.0
    %859 = vmatpush1.msra.mxu0 %v399
    %860 = vmatprep.subr.mxu0 0.0
    %861 = vmatpush1.msra.mxu0 %v400
    %862 = vmatprep.subr.mxu0 0.0
    %863 = vmatpush1.msra.mxu0 %v401
    %864 = vmatprep.subr.mxu0 0.0
    %865 = vmatpush1.msra.mxu0 %v402
    %866 = vmatprep.subr.mxu0 0.0
    %867 = vmatpush1.msra.mxu0 %v403
    %868 = vmatprep.subr.mxu0 0.0
    %869 = vmatpush1.msra.mxu0 %v404
    %870 = vmatprep.subr.mxu0 0.0
    %871 = vmatpush1.msra.mxu0 0.0
    %872 = vmatprep.subr.mxu0 0.0
    %873 = vmatpush1.msra.mxu0 0.0
    %874 = vmatprep.subr.mxu0 0.0
    %875 = vmatpush1.msra.mxu0 0.0
    %876 = vmatprep.subr.mxu0 0.0
    %877 = vmatpush1.msra.mxu0 0.0
    %878 = vmatprep.subr.mxu0 0.0
    %879 = vmatpush1.msra.mxu0 0.0
    %880 = vmatprep.subr.mxu0 0.0
    %881 = vmatpush1.msra.mxu0 0.0
    %882 = vmatprep.subr.mxu0 0.0
    %883 = vmatpush1.msra.mxu0 0.0
    %884 = vmatprep.subr.mxu0 0.0
    %885 = vmatpush1.msra.mxu0 0.0
    %886 = vmatprep.subr.mxu0 0.0
    %887 = vmatpush1.msra.mxu0 0.0
    %888 = vmatprep.subr.mxu0 0.0
    %889 = vmatpush1.msra.mxu0 0.0
    %890 = vmatprep.subr.mxu0 0.0
    %891 = vmatpush1.msra.mxu0 0.0
    %892 = vmatprep.subr.mxu0 0.0
    %893 = vmatpush1.msra.mxu0 0.0
    %894 = vmatprep.subr.mxu0 0.0
    %895 = vmatpush1.msra.mxu0 0.0
    %896 = vmatprep.subr.mxu0 0.0
    %897 = vmatpush1.msra.mxu0 0.0
    %898 = vmatprep.subr.mxu0 0.0
    %899 = vmatpush1.msra.mxu0 0.0
    %900 = vmatprep.subr.mxu0 0.0
    %901 = vmatpush1.msra.mxu0 0.0
    %902 = vmatprep.mubr.f32.mxu0 0.0
    %903 = vmatmul.mubr.f32.gmra.mrb[0].mxu0 %v837
    %v904 = vpop.f32.mrb[0].mxu0
    %v905 = vadd.f32 0.0, %v904
    %v906 = vpop.f32.mrb[0].mxu0
    %907 = vdwg.mxu0
    %v908 = vadd.f32 %v387, %v905
    %v909 = vmax.f32 %v908, 0.0
    %v910 = vld [vmem:[%s3] sm:$0xff]
    %v911 = vld [vmem:[%s3 + $0x8] sm:$0xff]
    %v912 = vld [vmem:[%s3 + $0x10] sm:$0xff]
    %v913 = vld [vmem:[%s3 + $0x18] sm:$0xff]
    %v914 = vld [vmem:[%s3 + $0x20] sm:$0xff]
    %v915 = vld [vmem:[%s3 + $0x28] sm:$0xff]
    %v916 = vld [vmem:[%s3 + $0x30] sm:$0xff]
    %v917 = vld [vmem:[%s3 + $0x38] sm:$0xff]
    %v918 = vld [vmem:[%s3 + $0x40] sm:$0xff]
    %v919 = vld [vmem:[%s3 + $0x48] sm:$0xff]
    %v920 = vld [vmem:[%s3 + $0x50] sm:$0xff]
    %v921 = vld [vmem:[%s3 + $0x58] sm:$0xff]
    %v922 = vld [vmem:[%s3 + $0x60] sm:$0xff]
    %v923 = vld [vmem:[%s3 + $0x68] sm:$0xff]
    %v924 = vld [vmem:[%s3 + $0x70] sm:$0xff]
    %v925 = vld [vmem:[%s3 + $0x78] sm:$0xff]
    %v926 = vld [vmem:[%s4] sm:$0x1]
    %v928 = vlaneseq
    %v929 = vshrl.u32 %v928, 7
    %v930 = vsub.s32 0, %v929
    %v931 = vrot.slane %v926, %v930
    %933 = vmatprep.subr.mxu0 0.0
    %934 = vmatpush1.msra.mxu0 %v910
    %935 = vmatprep.subr.mxu0 0.0
    %936 = vmatpush1.msra.mxu0 %v911
    %937 = vmatprep.subr.mxu0 0.0
    %938 = vmatpush1.msra.mxu0 %v912
    %939 = vmatprep.subr.mxu0 0.0
    %940 = vmatpush1.msra.mxu0 %v913
    %941 = vmatprep.subr.mxu0 0.0
    %942 = vmatpush1.msra.mxu0 %v914
    %943 = vmatprep.subr.mxu0 0.0
    %944 = vmatpush1.msra.mxu0 %v915
    %945 = vmatprep.subr.mxu0 0.0
    %946 = vmatpush1.msra.mxu0 %v916
    %947 = vmatprep.subr.mxu0 0.0
    %948 = vmatpush1.msra.mxu0 %v917
    %949 = vmatprep.subr.mxu0 0.0
    %950 = vmatpush1.msra.mxu0 %v918
    %951 = vmatprep.subr.mxu0 0.0
    %952 = vmatpush1.msra.mxu0 %v919
    %953 = vmatprep.subr.mxu0 0.0
    %954 = vmatpush1.msra.mxu0 %v920
    %955 = vmatprep.subr.mxu0 0.0
    %956 = vmatpush1.msra.mxu0 %v921
    %957 = vmatprep.subr.mxu0 0.0
    %958 = vmatpush1.msra.mxu0 %v922
    %959 = vmatprep.subr.mxu0 0.0
    %960 = vmatpush1.msra.mxu0 %v923
    %961 = vmatprep.subr.mxu0 0.0
    %962 = vmatpush1.msra.mxu0 %v924
    %963 = vmatprep.subr.mxu0 0.0
    %964 = vmatpush1.msra.mxu0 %v925
    %965 = vmatprep.subr.mxu0 0.0
    %966 = vmatpush1.msra.mxu0 0.0
    %967 = vmatprep.subr.mxu0 0.0
    %968 = vmatpush1.msra.mxu0 0.0
    %969 = vmatprep.subr.mxu0 0.0
    %970 = vmatpush1.msra.mxu0 0.0
    %971 = vmatprep.subr.mxu0 0.0
    %972 = vmatpush1.msra.mxu0 0.0
    %973 = vmatprep.subr.mxu0 0.0
    %974 = vmatpush1.msra.mxu0 0.0
    %975 = vmatprep.subr.mxu0 0.0
    %976 = vmatpush1.msra.mxu0 0.0
    %977 = vmatprep.subr.mxu0 0.0
    %978 = vmatpush1.msra.mxu0 0.0
    %979 = vmatprep.subr.mxu0 0.0
    %980 = vmatpush1.msra.mxu0 0.0
    %981 = vmatprep.subr.mxu0 0.0
    %982 = vmatpush1.msra.mxu0 0.0
    %983 = vmatprep.subr.mxu0 0.0
    %984 = vmatpush1.msra.mxu0 0.0
    %985 = vmatprep.subr.mxu0 0.0
    %986 = vmatpush1.msra.mxu0 0.0
    %987 = vmatprep.subr.mxu0 0.0
    %988 = vmatpush1.msra.mxu0 0.0
    %989 = vmatprep.subr.mxu0 0.0
    %990 = vmatpush1.msra.mxu0 0.0
    %991 = vmatprep.subr.mxu0 0.0
    %992 = vmatpush1.msra.mxu0 0.0
    %993 = vmatprep.subr.mxu0 0.0
    %994 = vmatpush1.msra.mxu0 0.0
    %995 = vmatprep.subr.mxu0 0.0
    %996 = vmatpush1.msra.mxu0 0.0
    %997 = vmatprep.mubr.f32.mxu0 0.0
    %998 = vmatmul.mubr.f32.gmra.mrb[0].mxu0 %v909
    %v999 = vpop.f32.mrb[0].mxu0
    %v1000 = vadd.f32 %v931, %v999
    %v1001 = vpop.f32.mrb[0].mxu0
    %1002 = vdwg.mxu0
    %vm1003 = vcmask 130048
    %1004 = vst.msk [vmem:[#allocation5] sm:$0xff] %vm1003, %v1000
    // Predicated region
    $region26: #{tpu_custom_call.1} parent=1 // pred_check
      _
    $region27: #{tpu_custom_call.1} parent=1 // pred_check_branch
      %1006 = sbr.rel (0) target = $region29
    $region28: #{tpu_custom_call.1} parent=1 // pred_region
      %s1008 = ssub.s32 128, 128
      %1009 = vsyncadd [#allocation4], %s1008
      %s1011 = sshll.u32 [#allocation5], 4
      %s1012 = int_to_ptr.vmem [resolvable:$true] %s1011
      %1014 = dma.vmem_to_hbm [thread:$0]  %s1012, 128, %s5, [#allocation4]
    $region29: #{tpu_custom_call.1} parent=1 // pred_fallthru
      _
    // Predicated region
    $region30: #{tpu_custom_call.1} parent=1 // pred_check
      _
    $region31: #{tpu_custom_call.1} parent=1 // pred_check_branch
      %1016 = sbr.rel (0) target = $region33
    $region32: #{tpu_custom_call.1} parent=1 // pred_region
      %1017 = dma.done [#allocation4], 128
    $region33: #{tpu_custom_call.1} parent=1 // pred_fallthru
      _
    %1018 = vsyncpa [#allocation3], 1
    %1019 = vsyncpa [#allocation4], 1

</llo_original>
